<compile_context>
chip_gen: v7x
topology: tpu7x:2x2x1
jax: 0.10.0
libtpu: 0.0.40
codegen_flags: <defaults>
</compile_context>

<pallas_src>
import functools

import jax
import jax.numpy as jnp
import numpy as np
from jax.experimental import pallas as pl
from jax.experimental.pallas import tpu as pltpu


# Conservative count of full-block f32 temporaries live inside the kernel body
# (widened x, two rolled copies, dw/dh/acc — the compiler reuses some of these).
_F32_TEMPS = 5


def _vmem_limit_bytes():
    """Generation-aware scoped-VMEM request: ~3/4 of physical, capped at 96 MiB.

    v7x has 64 MiB physical VMEM per TensorCore -> ~48 MiB; v5e/v6e (128 MiB)
    -> 96 MiB.  Falls back to a safe 48 MiB if the query is unavailable.
    """
    cap = 64 * 1024 * 1024
    try:
        info = pltpu.get_tpu_info()
        cap = int(getattr(info, "vmem_capacity_bytes", cap))
    except Exception:
        pass
    return int(min(max(cap * 3 // 4, 16 * 1024 * 1024), 96 * 1024 * 1024))


def _per_image_working_bytes(chw, itemsize):
    """VMEM bytes one image costs: double-buffered native input + f32 temporaries."""
    return chw * (2 * itemsize + 4 * _F32_TEMPS)


def _pick_bt(B, per_image_bytes, budget):
    """Images per grid step.

    Constraints / preferences:
      * block batch dim is a multiple of 8 (full sublane tiles) or the whole batch,
      * working set (per _per_image_working_bytes) fits `budget`,
      * >=4 (else >=2) grid steps so the next block's DMA overlaps compute and the
        "parallel" batch axis can be sharded across v7x's two TensorCores.
    """
    bt_budget = max(1, budget // max(per_image_bytes, 1))
    if B <= 8:
        # Tiny batch: one resident block; pipelining is irrelevant at this size.
        # TODO(synk): a B<=8 batch whose images exceed the VMEM budget would need
        # spatial tiling with a one-row halo; adversarial patches are far smaller.
        return B
    # Largest multiple-of-8 divisor of B that fits and leaves >=4 (else >=2) steps.
    for min_steps in (4, 2):
        bt = (min(bt_budget, B // min_steps) // 8) * 8
        while bt >= 8:
            if B % bt == 0:
                return bt
            bt -= 8
    # No suitable divisor: use an 8-aligned block near B//4 and zero-pad the batch.
    return max(8, (min(bt_budget, max(8, B // 4)) // 8) * 8)


def _tv_4d_kernel(masks_ref, x_ref, o_ref, *, shift_w, shift_h, inv_denom):
    # x_ref: (Bt, C*H*W) block, fully lane-dense.  masks_ref: (2, C*H*W) f32 0/1.
    x_nat = x_ref[...]                                  # native dtype
    xf = x_nat.astype(jnp.float32)

    # Forward differences via logical roll (XLU slot) on the native-dtype data,
    # widened to f32 only at the subtraction.  Wrap positions (w==W-1 for dw,
    # h==H-1 for dh, which also cover channel/image boundaries) are zeroed by the
    # precomputed masks.
    dw = pltpu.roll(x_nat, shift=shift_w, axis=1).astype(jnp.float32) - xf
    dh = pltpu.roll(x_nat, shift=shift_h, axis=1).astype(jnp.float32) - xf

    mw = masks_ref[0:1, :]                              # (1, C*H*W), broadcast on Bt
    mh = masks_ref[1:2, :]

    # One fused accumulation, one lane reduction -> per-image sums on the sublane axis.
    acc = dw * dw * mw + dh * dh * mh
    s = jnp.sum(acc, axis=1, keepdims=True)             # (Bt, 1)
    o_ref[...] = jnp.broadcast_to(s * inv_denom, o_ref.shape)


def _tv_3d_kernel(masks_ref, x_ref, o_ref, *, shift_w, shift_h, inv_denom):
    # x_ref: (C, H*W), lane-dense along H*W.  masks_ref: (2, H*W) f32 0/1.
    x_nat = x_ref[...]
    xf = x_nat.astype(jnp.float32)

    dw = pltpu.roll(x_nat, shift=shift_w, axis=1).astype(jnp.float32) - xf
    dh = pltpu.roll(x_nat, shift=shift_h, axis=1).astype(jnp.float32) - xf

    mw = masks_ref[0:1, :]
    mh = masks_ref[1:2, :]

    acc = jnp.abs(dw + 1e-6) * mw + jnp.abs(dh + 1e-6) * mh
    s = jnp.sum(acc, axis=1, keepdims=True)             # (C, 1)
    s = jnp.sum(s, axis=0, keepdims=True)               # (1, 1)
    o_ref[...] = jnp.broadcast_to(s * inv_denom, o_ref.shape)


def _total_variation2_4d(x):
    B, C, H, W = x.shape
    HW = H * W
    CHW = C * HW
    x2 = x.reshape(B, CHW)                              # free collapse in HBM

    vmem_limit = _vmem_limit_bytes()
    budget = vmem_limit // 2                            # headroom for output/masks/compiler scratch
    Bt = _pick_bt(B, _per_image_working_bytes(CHW, x.dtype.itemsize), budget)
    Bp = ((B + Bt - 1) // Bt) * Bt
    if Bp != B:
        # Zero-pad the batch to a multiple of the (8-aligned) block; padded images
        # contribute TV=0 and are sliced off below.
        x2 = jnp.pad(x2, ((0, Bp - B), (0, 0)))
    # TODO(synk): single images larger than the VMEM budget still need H-tiling
    # with a one-row halo and a pl.when-finalized accumulator.

    # Hoisted 0/1 masks (w != W-1 for dw, h != H-1 for dh), shared by every block.
    lane = jnp.arange(CHW, dtype=jnp.int32)
    masks = jnp.stack([(lane % W != W - 1).astype(jnp.float32),
                       (lane % HW < HW - W).astype(jnp.float32)])

    kern = functools.partial(_tv_4d_kernel, shift_w=CHW - 1, shift_h=CHW - W,
                             inv_denom=1.0 / CHW)
    out = pl.pallas_call(
        kern,
        out_shape=jax.ShapeDtypeStruct((Bp, 128), jnp.float32),
        grid=(Bp // Bt,),
        in_specs=[pl.BlockSpec((2, CHW), lambda i: (0, 0)),       # constant masks
                  pl.BlockSpec((Bt, CHW), lambda i: (i, 0))],     # image blocks
        out_specs=pl.BlockSpec((Bt, 128), lambda i: (i, 0)),
        compiler_params=pltpu.CompilerParams(
            dimension_semantics=("parallel",),
            vmem_limit_bytes=vmem_limit),
    )(masks, x2)
    return out[:B, 0]


def _total_variation2_3d(x):
    C, H, W = x.shape
    HW = H * W
    x2 = x.reshape(C, HW)                               # free collapse in HBM
    vmem_limit = _vmem_limit_bytes()
    # TODO(synk): patches whose (C, H*W) working set exceeds the scoped VMEM limit
    # need lane-axis chunking with a one-row halo + pl.when-finalized accumulator;
    # adversarial patches are small, so a single resident block suffices here.

    lane = jnp.arange(HW, dtype=jnp.int32)
    masks = jnp.stack([(lane % W != W - 1).astype(jnp.float32),
                       (lane < HW - W).astype(jnp.float32)])

    kern = functools.partial(_tv_3d_kernel, shift_w=HW - 1, shift_h=HW - W,
                             inv_denom=1.0 / (C * HW))
    out = pl.pallas_call(
        kern,
        out_shape=jax.ShapeDtypeStruct((1, 128), jnp.float32),
        grid=(1,),
        in_specs=[pl.BlockSpec((2, HW), lambda i: (0, 0)),
                  pl.BlockSpec((C, HW), lambda i: (0, 0))],
        out_specs=pl.BlockSpec((1, 128), lambda i: (0, 0)),
        compiler_params=pltpu.CompilerParams(
            dimension_semantics=("arbitrary",),
            vmem_limit_bytes=vmem_limit),
    )(masks, x2)
    return out[0, 0]


def total_variation2(adv_patch):
    """JAX/Pallas equivalent of TotalVariation2.forward."""
    if adv_patch.ndim == 3:
        return _total_variation2_3d(adv_patch)
    elif adv_patch.ndim == 4:
        return _total_variation2_4d(adv_patch)
    else:
        raise ValueError("adv_patch must be 3D (C,H,W) or 4D (B,C,H,W)")


# ---------------------------------------------------------------------------
# Pure-JAX references (for correctness checking only).
def _ref_4d(x):
    tv_h = jnp.sum((x[:, :, 1:, :] - x[:, :, :-1, :]) ** 2, axis=(1, 2, 3))
    tv_w = jnp.sum((x[:, :, :, 1:] - x[:, :, :, :-1]) ** 2, axis=(1, 2, 3))
    return (tv_h + tv_w) / (x.shape[1] * x.shape[2] * x.shape[3])


def _ref_3d(x):
    s1 = jnp.sum(jnp.abs(x[:, :, 1:] - x[:, :, :-1] + 1e-6))
    s2 = jnp.sum(jnp.abs(x[:, 1:, :] - x[:, :-1, :] + 1e-6))
    return (s1 + s2) / x.size


if __name__ == "__main__":
    key = jax.random.PRNGKey(0)
    k4, k4b, k3 = jax.random.split(key, 3)

    # 4D branch: small batch of patches, NCHW (single-block path).
    x4 = jax.random.normal(k4, (2, 4, 16, 16), dtype=jnp.float32)
    tv4 = jax.block_until_ready(total_variation2(x4))
    ref4 = _ref_4d(x4)
    np.testing.assert_allclose(np.asarray(tv4), np.asarray(ref4),
                               rtol=1e-5, atol=1e-5)

    # 4D branch: larger batch to exercise the multi-step (pipelined / v7x-shardable)
    # grid path with 8-aligned batch blocks.
    x4b = jax.random.normal(k4b, (16, 3, 8, 16), dtype=jnp.float32)
    tv4b = jax.block_until_ready(total_variation2(x4b))
    ref4b = _ref_4d(x4b)
    np.testing.assert_allclose(np.asarray(tv4b), np.asarray(ref4b),
                               rtol=1e-5, atol=1e-5)

    # 3D branch: single patch (C, H, W).
    x3 = jax.random.normal(k3, (4, 16, 16), dtype=jnp.float32)
    tv3 = jax.block_until_ready(total_variation2(x3))
    ref3 = _ref_3d(x3)
    np.testing.assert_allclose(np.asarray(tv3), np.asarray(ref3),
                               rtol=1e-5, atol=1e-5)

    print("KERNEL_OK")
</pallas_src>

<mosaic_0001>
module attributes {stable_mosaic.version = 11 : i64} {
  func.func @_tv_4d_kernel(%arg0: i32, %arg1: memref<2x1024xf32, #tpu.memory_space<vmem>>, %arg2: memref<2x1024xf32, #tpu.memory_space<vmem>>, %arg3: memref<2x128xf32, #tpu.memory_space<vmem>>) attributes {dimension_semantics = [#tpu.dimension_semantics<parallel>], iteration_bounds = array<i64: 1>, scalar_prefetch = 0 : i64, scratch_operands = 0 : i64, tpu.core_type = #tpu.core_type<tc>, window_params = [{pipeline_mode = #tpu.pipeline_mode<synchronous>, transform_indices = @transform_0, window_bounds = array<i64: 2, 1024>}, {transform_indices = @transform_1, window_bounds = array<i64: 2, 1024>}, {transform_indices = @transform_2, window_bounds = array<i64: 2, 128>}]} {
    %c0 = arith.constant 0 : index
    %c0_0 = arith.constant 0 : index
    %0 = vector.load %arg2[%c0, %c0_0] : memref<2x1024xf32, #tpu.memory_space<vmem>>, vector<2x1024xf32>
    %c1023_i32 = arith.constant 1023 : i32
    %1 = tpu.dynamic_rotate %0 by %c1023_i32 dim 1 : vector<2x1024xf32>, i32 -> vector<2x1024xf32>
    %2 = arith.subf %1, %0 : vector<2x1024xf32>
    %c1008_i32 = arith.constant 1008 : i32
    %3 = tpu.dynamic_rotate %0 by %c1008_i32 dim 1 : vector<2x1024xf32>, i32 -> vector<2x1024xf32>
    %4 = arith.subf %3, %0 : vector<2x1024xf32>
    %c0_1 = arith.constant 0 : index
    %c0_2 = arith.constant 0 : index
    %5 = vector.load %arg1[%c0_1, %c0_2] : memref<2x1024xf32, #tpu.memory_space<vmem>>, vector<1x1024xf32>
    %c1 = arith.constant 1 : index
    %c0_3 = arith.constant 0 : index
    %6 = vector.load %arg1[%c1, %c0_3] : memref<2x1024xf32, #tpu.memory_space<vmem>>, vector<1x1024xf32>
    %7 = arith.mulf %2, %2 : vector<2x1024xf32>
    %8 = vector.broadcast %5 : vector<1x1024xf32> to vector<2x1024xf32>
    %9 = arith.mulf %7, %8 : vector<2x1024xf32>
    %10 = arith.mulf %4, %4 : vector<2x1024xf32>
    %11 = vector.broadcast %6 : vector<1x1024xf32> to vector<2x1024xf32>
    %12 = arith.mulf %10, %11 : vector<2x1024xf32>
    %13 = arith.addf %9, %12 : vector<2x1024xf32>
    %cst = arith.constant dense<0.000000e+00> : vector<2xf32>
    %14 = vector.multi_reduction <add>, %13, %cst [1] : vector<2x1024xf32> to vector<2xf32>
    %15 = vector.shape_cast %14 : vector<2xf32> to vector<2x1xf32>
    %cst_4 = arith.constant 9.765625E-4 : f32
    %16 = vector.broadcast %cst_4 : f32 to vector<2x1xf32>
    %17 = arith.mulf %15, %16 : vector<2x1xf32>
    %18 = vector.shape_cast %17 : vector<2x1xf32> to vector<2x1xf32>
    %19 = vector.broadcast %18 : vector<2x1xf32> to vector<2x128xf32>
    %c0_5 = arith.constant 0 : index
    %c0_6 = arith.constant 0 : index
    %20 = vector.load %arg3[%c0_5, %c0_6] : memref<2x128xf32, #tpu.memory_space<vmem>>, vector<2x128xf32>
    tpu.vector_store %arg3[%c0_5, %c0_6], %19 {strides = array<i32>} : memref<2x128xf32, #tpu.memory_space<vmem>>, vector<2x128xf32>,
    return
  }
  func.func @transform_0(%arg0: i32) -> (i32, i32) {
    %c0_i32 = arith.constant 0 : i32
    %c0_i32_0 = arith.constant 0 : i32
    %c0_i32_1 = arith.constant 0 : i32
    return %c0_i32, %c0_i32_0 : i32, i32
  }
  func.func @transform_1(%arg0: i32) -> (i32, i32) {
    %c0_i32 = arith.constant 0 : i32
    %c0_i32_0 = arith.constant 0 : i32
    return %arg0, %c0_i32 : i32, i32
  }
  func.func @transform_2(%arg0: i32) -> (i32, i32) {
    %c0_i32 = arith.constant 0 : i32
    %c0_i32_0 = arith.constant 0 : i32
    return %arg0, %c0_i32 : i32, i32
  }
}

</mosaic_0001>

<llo_original>
// kernel: tpu_custom_call.1
$region0: #{tpu_custom_call.1}
  #allocation0 [shape = 'u32[]', space=smem, size = 0x4, offset = 0x4, fixed_abs, tag = 'smem constant byte address 0x4 - core index']
  #allocation1 [shape = 'u32[144,128]{1,0:T(1,128)}', space=vmem, size = 0x12000, scoped, tag = 'internal scratch']
  %s0 = inlined_call_operand.hbm [shape: f32[2,1024], index: 0, kind: input, shape index: {}]
  %s1 = inlined_call_operand.hbm [shape: f32[2,1024], index: 1, kind: input, shape index: {}]
  %s2 = inlined_call_operand.hbm [shape: f32[2,128], index: 2, kind: output, shape index: {}]
  %s3 = sld [smem:[#allocation0]]
  $region26: #{tpu_custom_call.1} parent=0
    _
  %s5 = ssub.s32 1, %s3
  %s6 = scalar_select 0, %s5, %s3
  $region1: #{tpu_custom_call.1} parent=0
    #allocation2 [shape = 'u8[8192]{0}', space=vmem, size = 0x2000, scoped, tag = 'input window, operand 0, single buffered']
    #allocation3 [shape = 's32[1]{0}', space=sflag, size = 0x4, scoped, tag = 'scoped memory for tpu_custom_call.1']
    #allocation4 [shape = 's32[1]{0}', space=sflag, size = 0x4, scoped, tag = 'scoped memory for tpu_custom_call.1']
    #allocation5 [shape = 'u8[8192]{0}', space=vmem, size = 0x2000, scoped, tag = 'input window, operand 1, single buffered']
    #allocation6 [shape = 's32[1]{0}', space=sflag, size = 0x4, scoped, tag = 'scoped memory for tpu_custom_call.1']
    #allocation7 [shape = 'u8[1024]{0}', space=vmem, size = 0x400, scoped, tag = 'output window, operand 0, single buffered']
    %7 = vsyncpa [#allocation3], 0
    %8 = vsyncpa [#allocation6], 0
    %9 = vsyncpa [#allocation4], 0
    // Predicated region
    $region2: #{tpu_custom_call.1} parent=1 // pred_check
      _
    $region3: #{tpu_custom_call.1} parent=1 // pred_check_branch
      %11 = sbr.rel (0) target = $region5
    $region4: #{tpu_custom_call.1} parent=1 // pred_region
      %s13 = ssub.s32 256, 256
      %14 = vsyncadd [#allocation3], %s13
      %s16 = sshll.u32 [#allocation2], 4
      %s17 = int_to_ptr.vmem [resolvable:$true] %s16
      %19 = dma.hbm_to_vmem [thread:$0]  %s0, 256, %s17, [#allocation3]
    $region5: #{tpu_custom_call.1} parent=1 // pred_fallthru
      _
    // Predicated region
    $region6: #{tpu_custom_call.1} parent=1 // pred_check
      _
    $region7: #{tpu_custom_call.1} parent=1 // pred_check_branch
      %21 = sbr.rel (0) target = $region9
    $region8: #{tpu_custom_call.1} parent=1 // pred_region
      %s23 = ssub.s32 256, 256
      %24 = vsyncadd [#allocation6], %s23
      %s26 = sshll.u32 [#allocation5], 4
      %s27 = int_to_ptr.vmem [resolvable:$true] %s26
      %29 = dma.hbm_to_vmem [thread:$0]  %s1, 256, %s27, [#allocation6]
    $region9: #{tpu_custom_call.1} parent=1 // pred_fallthru
      _
    // Predicated region
    $region10: #{tpu_custom_call.1} parent=1 // pred_check
      _
    $region11: #{tpu_custom_call.1} parent=1 // pred_check_branch
      %31 = sbr.rel (0) target = $region13
    $region12: #{tpu_custom_call.1} parent=1 // pred_region
      %32 = dma.done [#allocation3], 256
    $region13: #{tpu_custom_call.1} parent=1 // pred_fallthru
      _
    // Predicated region
    $region14: #{tpu_custom_call.1} parent=1 // pred_check
      _
    $region15: #{tpu_custom_call.1} parent=1 // pred_check_branch
      %34 = sbr.rel (0) target = $region17
    $region16: #{tpu_custom_call.1} parent=1 // pred_region
      %35 = dma.done [#allocation6], 256
    $region17: #{tpu_custom_call.1} parent=1 // pred_fallthru
      _
    %v36 = vld [vmem:[#allocation5] sm:$0xff]
    %v37 = vld [vmem:[#allocation5 + $0x8] sm:$0xff]
    %v40 = vcombine.high %v36, %v36
    %v42 = vunpack.c.l.s4 1983009808
    %v43 = vunpack.c.0.s8 %v42
    %v44 = vlaneseq
    %v45 = vshrl.u32 %v44, 7
    %v46 = vsub.s32 %v43, %v45
    %v47 = vrot.slane %v36, %v46
    %v49 = vunpack.c.l.s4 1983009808
    %v50 = vunpack.c.0.s8 %v49
    %v51 = vlaneseq
    %v52 = vshrl.u32 %v51, 7
    %v53 = vsub.s32 %v50, %v52
    %v54 = vrot.slane %v40, %v53
    %v55 = vcombine.high %v47, %v47
    %v56 = vcombine.high %v54, %v54
    %v57 = vcombine.high %v37, %v37
    %v59 = vunpack.c.l.s4 1983009808
    %v60 = vunpack.c.0.s8 %v59
    %v61 = vlaneseq
    %v62 = vshrl.u32 %v61, 7
    %v63 = vsub.s32 %v60, %v62
    %v64 = vrot.slane %v37, %v63
    %v66 = vunpack.c.l.s4 1983009808
    %v67 = vunpack.c.0.s8 %v66
    %v68 = vlaneseq
    %v69 = vshrl.u32 %v68, 7
    %v70 = vsub.s32 %v67, %v69
    %v71 = vrot.slane %v57, %v70
    %v72 = vcombine.high %v64, %v64
    %v73 = vcombine.high %v71, %v71
    %82 = vrot.lane.b32.xlu0 %v47, 127
    %v83 = vpop.permute.xlu0 %82
    %84 = vrot.lane.b32.xlu0 %v55, 127
    %v85 = vpop.permute.xlu0 %84
    %86 = vrot.lane.b32.xlu0 %v54, 127
    %v87 = vpop.permute.xlu0 %86
    %88 = vrot.lane.b32.xlu0 %v56, 127
    %v89 = vpop.permute.xlu0 %88
    %90 = vrot.lane.b32.xlu0 %v64, 127
    %v91 = vpop.permute.xlu0 %90
    %92 = vrot.lane.b32.xlu0 %v72, 127
    %v93 = vpop.permute.xlu0 %92
    %94 = vrot.lane.b32.xlu0 %v71, 127
    %v95 = vpop.permute.xlu0 %94
    %96 = vrot.lane.b32.xlu0 %v73, 127
    %v97 = vpop.permute.xlu0 %96
    %v98 = vlaneseq
    %v99 = vand.u32 %v98, 127
    %vm100 = vcmp.lt.s32.totalorder %v99, 127
    %v101 = vsel %vm100, %v95, %v97
    %v102 = vsel %vm100, %v93, %v95
    %v103 = vsel %vm100, %v91, %v93
    %v104 = vsel %vm100, %v89, %v91
    %v105 = vsel %vm100, %v87, %v89
    %v106 = vsel %vm100, %v85, %v87
    %v107 = vsel %vm100, %v83, %v85
    %v108 = vsel %vm100, %v97, %v83
    %v109 = vsub.f32 %v107, %v47
    %v110 = vsub.f32 %v106, %v55
    %v111 = vsub.f32 %v105, %v54
    %v112 = vsub.f32 %v104, %v56
    %v113 = vsub.f32 %v103, %v64
    %v114 = vsub.f32 %v102, %v72
    %v115 = vsub.f32 %v101, %v71
    %v116 = vsub.f32 %v108, %v73
    %117 = vrot.lane.b32.xlu0 %v47, 112
    %v118 = vpop.permute.xlu0 %117
    %119 = vrot.lane.b32.xlu0 %v55, 112
    %v120 = vpop.permute.xlu0 %119
    %121 = vrot.lane.b32.xlu0 %v54, 112
    %v122 = vpop.permute.xlu0 %121
    %123 = vrot.lane.b32.xlu0 %v56, 112
    %v124 = vpop.permute.xlu0 %123
    %125 = vrot.lane.b32.xlu0 %v64, 112
    %v126 = vpop.permute.xlu0 %125
    %127 = vrot.lane.b32.xlu0 %v72, 112
    %v128 = vpop.permute.xlu0 %127
    %129 = vrot.lane.b32.xlu0 %v71, 112
    %v130 = vpop.permute.xlu0 %129
    %131 = vrot.lane.b32.xlu0 %v73, 112
    %v132 = vpop.permute.xlu0 %131
    %vm133 = vcmp.lt.s32.totalorder %v99, 112
    %v134 = vsel %vm133, %v130, %v132
    %v135 = vsel %vm133, %v128, %v130
    %v136 = vsel %vm133, %v126, %v128
    %v137 = vsel %vm133, %v124, %v126
    %v138 = vsel %vm133, %v122, %v124
    %v139 = vsel %vm133, %v120, %v122
    %v140 = vsel %vm133, %v118, %v120
    %v141 = vsel %vm133, %v132, %v118
    %v142 = vsub.f32 %v140, %v47
    %v143 = vsub.f32 %v139, %v55
    %v144 = vsub.f32 %v138, %v54
    %v145 = vsub.f32 %v137, %v56
    %v146 = vsub.f32 %v136, %v64
    %v147 = vsub.f32 %v135, %v72
    %v148 = vsub.f32 %v134, %v71
    %v149 = vsub.f32 %v141, %v73
    %v150 = vld [vmem:[#allocation2] ss:$2 sm:$0xff]
    %s151 = scalar_lea.vmem [#allocation2], 1
    %v152 = vld [vmem:[%s151] ss:$2 sm:$0xff]
    %v153 = vmul.f32 %v109, %v109
    %v154 = vmul.f32 %v110, %v110
    %v155 = vmul.f32 %v111, %v111
    %v156 = vmul.f32 %v112, %v112
    %v157 = vmul.f32 %v113, %v113
    %v158 = vmul.f32 %v114, %v114
    %v159 = vmul.f32 %v115, %v115
    %v160 = vmul.f32 %v116, %v116
    %v162 = vlaneseq
    %v163 = vshrl.u32 %v162, 7
    %v164 = vsub.s32 0, %v163
    %v165 = vrot.slane %v150, %v164
    %v166 = vlaneseq
    %v167 = vshrl.u32 %v166, 7
    %v168 = vsub.s32 1, %v167
    %v169 = vrot.slane %v150, %v168
    %v170 = vlaneseq
    %v171 = vshrl.u32 %v170, 7
    %v172 = vsub.s32 2, %v171
    %v173 = vrot.slane %v150, %v172
    %v174 = vlaneseq
    %v175 = vshrl.u32 %v174, 7
    %v176 = vsub.s32 3, %v175
    %v177 = vrot.slane %v150, %v176
    %v178 = vlaneseq
    %v179 = vshrl.u32 %v178, 7
    %v180 = vsub.s32 4, %v179
    %v181 = vrot.slane %v150, %v180
    %v182 = vlaneseq
    %v183 = vshrl.u32 %v182, 7
    %v184 = vsub.s32 5, %v183
    %v185 = vrot.slane %v150, %v184
    %v186 = vlaneseq
    %v187 = vshrl.u32 %v186, 7
    %v188 = vsub.s32 6, %v187
    %v189 = vrot.slane %v150, %v188
    %v190 = vlaneseq
    %v191 = vshrl.u32 %v190, 7
    %v192 = vsub.s32 7, %v191
    %v193 = vrot.slane %v150, %v192
    %v202 = vmul.f32 %v153, %v165
    %v203 = vmul.f32 %v154, %v169
    %v204 = vmul.f32 %v155, %v173
    %v205 = vmul.f32 %v156, %v177
    %v206 = vmul.f32 %v157, %v181
    %v207 = vmul.f32 %v158, %v185
    %v208 = vmul.f32 %v159, %v189
    %v209 = vmul.f32 %v160, %v193
    %v210 = vmul.f32 %v142, %v142
    %v211 = vmul.f32 %v143, %v143
    %v212 = vmul.f32 %v144, %v144
    %v213 = vmul.f32 %v145, %v145
    %v214 = vmul.f32 %v146, %v146
    %v215 = vmul.f32 %v147, %v147
    %v216 = vmul.f32 %v148, %v148
    %v217 = vmul.f32 %v149, %v149
    %v219 = vlaneseq
    %v220 = vshrl.u32 %v219, 7
    %v221 = vsub.s32 0, %v220
    %v222 = vrot.slane %v152, %v221
    %v223 = vlaneseq
    %v224 = vshrl.u32 %v223, 7
    %v225 = vsub.s32 1, %v224
    %v226 = vrot.slane %v152, %v225
    %v227 = vlaneseq
    %v228 = vshrl.u32 %v227, 7
    %v229 = vsub.s32 2, %v228
    %v230 = vrot.slane %v152, %v229
    %v231 = vlaneseq
    %v232 = vshrl.u32 %v231, 7
    %v233 = vsub.s32 3, %v232
    %v234 = vrot.slane %v152, %v233
    %v235 = vlaneseq
    %v236 = vshrl.u32 %v235, 7
    %v237 = vsub.s32 4, %v236
    %v238 = vrot.slane %v152, %v237
    %v239 = vlaneseq
    %v240 = vshrl.u32 %v239, 7
    %v241 = vsub.s32 5, %v240
    %v242 = vrot.slane %v152, %v241
    %v243 = vlaneseq
    %v244 = vshrl.u32 %v243, 7
    %v245 = vsub.s32 6, %v244
    %v246 = vrot.slane %v152, %v245
    %v247 = vlaneseq
    %v248 = vshrl.u32 %v247, 7
    %v249 = vsub.s32 7, %v248
    %v250 = vrot.slane %v152, %v249
    %v259 = vmul.f32 %v210, %v222
    %v260 = vmul.f32 %v211, %v226
    %v261 = vmul.f32 %v212, %v230
    %v262 = vmul.f32 %v213, %v234
    %v263 = vmul.f32 %v214, %v238
    %v264 = vmul.f32 %v215, %v242
    %v265 = vmul.f32 %v216, %v246
    %v266 = vmul.f32 %v217, %v250
    %v267 = vadd.f32 %v202, %v259
    %v268 = vadd.f32 %v203, %v260
    %v269 = vadd.f32 %v204, %v261
    %v270 = vadd.f32 %v205, %v262
    %v271 = vadd.f32 %v206, %v263
    %v272 = vadd.f32 %v207, %v264
    %v273 = vadd.f32 %v208, %v265
    %v274 = vadd.f32 %v209, %v266
    %vm275 = vcmask 1041408
    %v276 = vsel %vm275, %v267, 0.0
    %v277 = vsel %vm275, %v268, 0.0
    %v278 = vadd.f32 %v276, %v277
    %v279 = vsel %vm275, %v269, 0.0
    %v280 = vadd.f32 %v278, %v279
    %v281 = vsel %vm275, %v270, 0.0
    %v282 = vadd.f32 %v280, %v281
    %v283 = vsel %vm275, %v271, 0.0
    %v284 = vadd.f32 %v282, %v283
    %v285 = vsel %vm275, %v272, 0.0
    %v286 = vadd.f32 %v284, %v285
    %v287 = vsel %vm275, %v273, 0.0
    %v288 = vadd.f32 %v286, %v287
    %v289 = vsel %vm275, %v274, 0.0
    %v290 = vadd.f32 %v288, %v289
    %291 = vadd.xlane.f32.xlu0 %v290
    %v292 = vpop.xlane.xlu0 %291
    %v293 = vmul.f32 %v292, 0.0009765625
    %294 = vst [vmem:[#allocation7] sm:$0x3] %v293
    // Predicated region
    $region18: #{tpu_custom_call.1} parent=1 // pred_check
      _
    $region19: #{tpu_custom_call.1} parent=1 // pred_check_branch
      %296 = sbr.rel (0) target = $region21
    $region20: #{tpu_custom_call.1} parent=1 // pred_region
      %s298 = ssub.s32 32, 32
      %299 = vsyncadd [#allocation4], %s298
      %s301 = sshll.u32 [#allocation7], 4
      %s302 = int_to_ptr.vmem [resolvable:$true] %s301
      %304 = dma.vmem_to_hbm [thread:$0]  %s302, 32, %s2, [#allocation4]
    $region21: #{tpu_custom_call.1} parent=1 // pred_fallthru
      _
    // Predicated region
    $region22: #{tpu_custom_call.1} parent=1 // pred_check
      _
    $region23: #{tpu_custom_call.1} parent=1 // pred_check_branch
      %306 = sbr.rel (0) target = $region25
    $region24: #{tpu_custom_call.1} parent=1 // pred_region
      %307 = dma.done [#allocation4], 32
    $region25: #{tpu_custom_call.1} parent=1 // pred_fallthru
      _
    %308 = vsyncpa [#allocation3], 1
    %309 = vsyncpa [#allocation6], 1
    %310 = vsyncpa [#allocation4], 1

</llo_original>
